<compile_context>
chip_gen: v7x
topology: tpu7x:2x2x1
jax: 0.10.0
libtpu: 0.0.40
codegen_flags: <defaults>
</compile_context>

<pallas_src>
import functools

import jax
import jax.numpy as jnp
from jax import lax
from jax.experimental import pallas as pl
from jax.experimental.pallas import tpu as pltpu


def _round_up(x, m):
    return ((x + m - 1) // m) * m


# ----------------------------------------------------------------------------
# Parameter preparation — run ONCE at init time, not per forward call (item 9).
# ----------------------------------------------------------------------------
def prepare_params(emb_weight, fc_weight=None, fc_bias=None, *,
                   compute_dtype=jnp.float32):
    vocab_size, embed_dim = emb_weight.shape
    d_pad = _round_up(max(embed_dim, 128), 128)          # lane-dense feature dim
    v_pad = _round_up(max(vocab_size, 128), 128)

    emb_p = jnp.zeros((v_pad, d_pad), compute_dtype)
    emb_p = emb_p.at[:vocab_size, :embed_dim].set(emb_weight.astype(compute_dtype))

    params = dict(emb=emb_p, wt=None, bias=None,
                  vocab_size=vocab_size, embed_dim=embed_dim,
                  v_pad=v_pad, d_pad=d_pad, compute_dtype=compute_dtype)

    if fc_weight is not None:
        wt = fc_weight.astype(compute_dtype).T           # pre-transpose: no in-kernel .T
        wt_p = jnp.zeros((d_pad, d_pad), compute_dtype)
        wt_p = wt_p.at[:embed_dim, :embed_dim].set(wt)
        b_p = jnp.zeros((1, d_pad), jnp.float32)
        b_p = b_p.at[0, :embed_dim].set(jnp.reshape(fc_bias, (-1,)).astype(jnp.float32))
        params["wt"] = wt_p
        params["bias"] = b_p
    return params


# ----------------------------------------------------------------------------
# Kernel 1: small-vocab fast path — gather-by-matmul, zero manual DMAs.
#   pooled = (coeff[bag_tile, T] @ onehot[T, V]) @ table[V, D]
# ----------------------------------------------------------------------------
def _onehot_pool_kernel(text_ref, starts_ref, ends_ref, emb_ref, *rest,
                        bag_tile, t_pad, v_pad, linear):
    if linear:
        wt_ref, b_ref, out_ref = rest
    else:
        (out_ref,) = rest
    cdt = emb_ref.dtype

    starts = starts_ref[...]                                   # [bag_tile, 1] i32
    ends = ends_ref[...]                                       # [bag_tile, 1] i32
    count = (ends - starts).astype(jnp.float32)
    inv = jnp.where(count > 0.0, 1.0 / jnp.maximum(count, 1.0), 0.0)

    t_idx = lax.broadcasted_iota(jnp.int32, (bag_tile, t_pad), 1)
    in_bag = jnp.logical_and(t_idx >= starts, t_idx < ends)
    coeff = jnp.where(in_bag, inv, 0.0)                        # [bag_tile, t_pad] f32

    toks = text_ref[...]                                       # [t_pad, 1] i32 (-1 pad)
    v_idx = lax.broadcasted_iota(jnp.int32, (t_pad, v_pad), 1)
    onehot = (toks == v_idx).astype(cdt)                       # [t_pad, v_pad]

    coeff_v = jnp.dot(coeff.astype(cdt), onehot,
                      preferred_element_type=jnp.float32)      # [bag_tile, v_pad]
    pooled = jnp.dot(coeff_v.astype(cdt), emb_ref[...],
                     preferred_element_type=jnp.float32)       # [bag_tile, d_pad]

    if linear:
        out_ref[...] = (jnp.dot(pooled.astype(wt_ref.dtype), wt_ref[...],
                                preferred_element_type=jnp.float32)
                        + b_ref[...]).astype(out_ref.dtype)
    else:
        out_ref[...] = pooled.astype(out_ref.dtype)


# ----------------------------------------------------------------------------
# Kernel 2: general path — per-tile, chunked, double-buffered row gather.
# ----------------------------------------------------------------------------
def _gather_pool_kernel(text_sm, bounds_sm,            # SMEM scalar prefetch
                        starts_ref, ends_ref,          # VMEM [bag_tile, 1] i32
                        emb_hbm,                       # HBM [v_pad, d_pad]
                        *rest,
                        vocab_size, total_tokens, chunk, bag_tile, linear):
    if linear:
        wt_ref, b_ref, out_ref, rows_ref, acc_ref, sem = rest
    else:
        out_ref, rows_ref, acc_ref, sem = rest
    cdt = rows_ref.dtype

    i = pl.program_id(0)
    tile_start = bounds_sm[i * bag_tile]               # first token of this tile
    tile_end = bounds_sm[(i + 1) * bag_tile]           # first token of next tile (or T)
    n_chunks = (tile_end - tile_start + (chunk - 1)) // chunk

    starts = starts_ref[...]
    ends = ends_ref[...]
    count = (ends - starts).astype(jnp.float32)
    inv = jnp.where(count > 0.0, 1.0 / jnp.maximum(count, 1.0), 0.0)

    def start_gather(c, slot):
        base = tile_start + c * chunk
        off = slot * chunk
        @pl.loop(0, chunk)
        def _(j):
            pos = jnp.minimum(base + j, total_tokens - 1)           # clamp tail
            row = jnp.clip(text_sm[pos], 0, vocab_size - 1)          # guard OOB ids
            pltpu.make_async_copy(
                emb_hbm.at[pl.ds(row, 1), :],
                rows_ref.at[pl.ds(off + j, 1), :],
                sem.at[slot]).start()

    def wait_gather(slot):
        off = slot * chunk
        @pl.loop(0, chunk)
        def _(j):
            # Same (1, d_pad) shape / byte count as each started copy; only
            # the semaphore (and matching byte count) matter for the wait.
            pltpu.make_async_copy(
                emb_hbm.at[pl.ds(0, 1), :],
                rows_ref.at[pl.ds(off + j, 1), :],
                sem.at[slot]).wait()

    acc_ref[...] = jnp.zeros_like(acc_ref)

    @pl.when(n_chunks > 0)
    def _():
        start_gather(0, 0)

    def body(c, carry):
        slot = c & 1
        # Prefetch the next chunk into the other slot before blocking.
        @pl.when(c + 1 < n_chunks)
        def _():
            start_gather(c + 1, (c + 1) & 1)
        # Build mean coefficients on the VPU while the row DMAs land.
        base = tile_start + c * chunk
        tok = base + lax.broadcasted_iota(jnp.int32, (bag_tile, chunk), 1)
        in_bag = jnp.logical_and(tok >= starts, tok < ends)
        coeff = jnp.where(in_bag, inv, 0.0)                          # f32 (v5e VPU)
        wait_gather(slot)
        off = pl.multiple_of(slot * chunk, 128)
        rows = rows_ref[pl.ds(off, chunk), :]
        acc_ref[...] += jnp.dot(coeff.astype(cdt), rows,
                                preferred_element_type=jnp.float32)
        return carry

    lax.fori_loop(0, n_chunks, body, 0)

    pooled = acc_ref[...]
    if linear:
        out_ref[...] = (jnp.dot(pooled.astype(wt_ref.dtype), wt_ref[...],
                                preferred_element_type=jnp.float32)
                        + b_ref[...]).astype(out_ref.dtype)
    else:
        out_ref[...] = pooled.astype(out_ref.dtype)


# ----------------------------------------------------------------------------
# Forward wrapper.
# ----------------------------------------------------------------------------
def text_embedding_forward(text, offsets, params, *, bag_tile=128,
                           token_chunk=512, use_gather=None):
    """EmbeddingBag(mode='mean')(text, offsets), then optional Linear."""
    text = jnp.asarray(text, jnp.int32)
    offsets = jnp.asarray(offsets, jnp.int32)
    num_tokens = int(text.shape[0])
    num_bags = int(offsets.shape[0])

    vocab_size = params["vocab_size"]
    embed_dim = params["embed_dim"]
    v_pad = params["v_pad"]
    d_pad = params["d_pad"]
    cdt = params["compute_dtype"]
    isz = jnp.dtype(cdt).itemsize
    linear = params["wt"] is not None

    # bag_tile = M of the matmuls: MXU-sized, clamped to the (padded) batch.
    bag_tile = _round_up(max(8, min(bag_tile, _round_up(num_bags, 8))), 8)
    b_pad = _round_up(num_bags, bag_tile)
    n_tiles = b_pad // bag_tile

    # Per-bag [start, end) as [b_pad, 1] columns; padded bags are empty.
    ends = jnp.concatenate([offsets[1:], jnp.array([num_tokens], jnp.int32)])
    starts_p = jnp.full((b_pad, 1), num_tokens, jnp.int32).at[:num_bags, 0].set(offsets)
    ends_p = jnp.full((b_pad, 1), num_tokens, jnp.int32).at[:num_bags, 0].set(ends)

    out_shape = jax.ShapeDtypeStruct((b_pad, d_pad), jnp.float32)

    if use_gather is None:
        t_sv = _round_up(max(num_tokens, 128), 128)
        small = (v_pad * d_pad * isz <= 2 * 2**20) and (t_sv * v_pad * isz <= 2 * 2**20)
        use_gather = not small

    if not use_gather:
        # ---------------- Small-vocab path (no manual DMAs) -----------------
        t_pad = _round_up(max(num_tokens, 128), 128)
        text_v = jnp.full((t_pad, 1), -1, jnp.int32).at[:num_tokens, 0].set(text)
        in_specs = [
            pl.BlockSpec((t_pad, 1), lambda i: (0, 0)),
            pl.BlockSpec((bag_tile, 1), lambda i: (i, 0)),
            pl.BlockSpec((bag_tile, 1), lambda i: (i, 0)),
            pl.BlockSpec((v_pad, d_pad), lambda i: (0, 0)),
        ]
        args = [text_v, starts_p, ends_p, params["emb"]]
        if linear:
            in_specs += [pl.BlockSpec((d_pad, d_pad), lambda i: (0, 0)),
                         pl.BlockSpec((1, d_pad), lambda i: (0, 0))]
            args += [params["wt"], params["bias"]]
        kernel = functools.partial(_onehot_pool_kernel, bag_tile=bag_tile,
                                   t_pad=t_pad, v_pad=v_pad, linear=linear)
        out_p = pl.pallas_call(
            kernel,
            out_shape=out_shape,
            grid_spec=pltpu.PrefetchScalarGridSpec(
                num_scalar_prefetch=0, grid=(n_tiles,),
                in_specs=in_specs,
                out_specs=pl.BlockSpec((bag_tile, d_pad), lambda i: (i, 0))),
            compiler_params=pltpu.CompilerParams(
                dimension_semantics=("parallel",)),
        )(*args)
        return out_p[:num_bags, :embed_dim]

    # ------------- Gather path (per-tile chunked double-buffered DMA) -------
    chunk = _round_up(max(128, min(token_chunk, max(num_tokens, 1))), 128)
    # bounds[g] = first token of bag g (== T for padded bags); bounds[b_pad] = T.
    bounds_p = jnp.full((b_pad + 1,), num_tokens, jnp.int32).at[:num_bags].set(offsets)

    in_specs = [
        pl.BlockSpec((bag_tile, 1), lambda i, txt, bnd: (i, 0)),
        pl.BlockSpec((bag_tile, 1), lambda i, txt, bnd: (i, 0)),
        pl.BlockSpec(memory_space=pl.ANY),          # embedding table stays in HBM
    ]
    args = [text, bounds_p, starts_p, ends_p, params["emb"]]
    if linear:
        in_specs += [pl.BlockSpec((d_pad, d_pad), lambda i, txt, bnd: (0, 0)),
                     pl.BlockSpec((1, d_pad), lambda i, txt, bnd: (0, 0))]
        args += [params["wt"], params["bias"]]

    scratch_shapes = [
        pltpu.VMEM((2 * chunk, d_pad), cdt),         # double-buffered gathered rows
        pltpu.VMEM((bag_tile, d_pad), jnp.float32),  # f32 accumulator
        pltpu.SemaphoreType.DMA((2,)),               # one shared DMA sem per slot
    ]

    kernel = functools.partial(_gather_pool_kernel, vocab_size=vocab_size,
                               total_tokens=max(num_tokens, 1), chunk=chunk,
                               bag_tile=bag_tile, linear=linear)

    # VMEM budget (v7x: 64 MiB physical, 32 MiB scoped default).
    vmem_est = (2 * chunk * d_pad * isz + bag_tile * d_pad * 4
                + 2 * bag_tile * d_pad * 4 + 4 * bag_tile * 4)
    if linear:
        vmem_est += 2 * (d_pad * d_pad * isz + d_pad * 4)
    cp = dict(dimension_semantics=("parallel",))
    if vmem_est > 12 * 2**20:
        cp["vmem_limit_bytes"] = min(int(vmem_est * 2), 64 * 2**20)

    approx_chunks = n_tiles * max(1, -(-num_tokens // chunk))
    flops = 2 * bag_tile * chunk * d_pad * approx_chunks
    if linear:
        flops += 2 * b_pad * d_pad * d_pad
    bytes_accessed = (isz * approx_chunks * chunk * d_pad      # gathered rows
                      + 4 * b_pad * d_pad + 4 * num_tokens + 12 * b_pad
                      + (isz * d_pad * d_pad + 4 * d_pad if linear else 0))

    out_p = pl.pallas_call(
        kernel,
        out_shape=out_shape,
        grid_spec=pltpu.PrefetchScalarGridSpec(
            num_scalar_prefetch=2,                  # token ids + bag bounds -> SMEM
            grid=(n_tiles,),
            in_specs=in_specs,
            out_specs=pl.BlockSpec((bag_tile, d_pad), lambda i, txt, bnd: (i, 0)),
            scratch_shapes=scratch_shapes),
        compiler_params=pltpu.CompilerParams(**cp),
        cost_estimate=pl.CostEstimate(flops=flops, transcendentals=0,
                                      bytes_accessed=bytes_accessed),
    )(*args)
    return out_p[:num_bags, :embed_dim]


# ----------------------------------------------------------------------------
# Pure-JAX reference (mirrors torch nn.EmbeddingBag(mean) + nn.Linear).
# ----------------------------------------------------------------------------
def reference_forward(text, offsets, emb_weight, fc_weight=None, fc_bias=None,
                      linear_trans=True):
    T = text.shape[0]
    B = offsets.shape[0]
    ends = jnp.concatenate([offsets[1:], jnp.array([T], jnp.int32)])
    rows = emb_weight[text]
    outs = []
    for b in range(B):
        s, e = int(offsets[b]), int(ends[b])
        if e > s:
            outs.append(rows[s:e].mean(axis=0))
        else:
            outs.append(jnp.zeros((emb_weight.shape[1],), jnp.float32))
    x = jnp.stack(outs, axis=0)
    if linear_trans:
        x = x @ fc_weight.T + jnp.reshape(fc_bias, (-1,))
    return x


if __name__ == "__main__":
    vocab_size = 64
    embed_dim = 32
    num_tokens = 16
    num_bags = 4
    initrange = 0.5

    key = jax.random.PRNGKey(0)
    k_emb, k_fc, k_text = jax.random.split(key, 3)

    # init_weights: uniform(-0.5, 0.5) weights, zero bias.
    emb_weight = jax.random.uniform(
        k_emb, (vocab_size, embed_dim), jnp.float32, -initrange, initrange)
    fc_weight = jax.random.uniform(
        k_fc, (embed_dim, embed_dim), jnp.float32, -initrange, initrange)
    fc_bias = jnp.zeros((embed_dim,), jnp.float32)

    # Inputs: flat token id list + bag offsets (EmbeddingBag convention).
    text = jax.random.randint(k_text, (num_tokens,), 0, vocab_size, jnp.int32)
    offsets = jnp.array([0, 3, 7, 12], jnp.int32)

    ref_lin = reference_forward(text, offsets, emb_weight, fc_weight, fc_bias, True)
    ref_nolin = reference_forward(text, offsets, emb_weight, None, None, False)

    # 1) f32 params, small-vocab (gather-by-matmul) path — the demo config.
    p32 = prepare_params(emb_weight, fc_weight, fc_bias, compute_dtype=jnp.float32)
    out = jax.block_until_ready(text_embedding_forward(text, offsets, p32))
    assert out.shape == (num_bags, embed_dim)
    assert jnp.allclose(out, ref_lin, atol=1e-5, rtol=1e-5), "mismatch (small-vocab f32)"

    # 2) f32 params, forced DMA row-gather path (per-tile chunked pipeline).
    out_g = jax.block_until_ready(
        text_embedding_forward(text, offsets, p32, use_gather=True))
    assert jnp.allclose(out_g, ref_lin, atol=1e-5, rtol=1e-5), "mismatch (gather f32)"

    # 3) bf16 MXU operands (native MXU throughput), f32 accumulation.
    pbf = prepare_params(emb_weight, fc_weight, fc_bias, compute_dtype=jnp.bfloat16)
    out_bf = jax.block_until_ready(text_embedding_forward(text, offsets, pbf))
    assert jnp.allclose(out_bf, ref_lin, atol=5e-2, rtol=5e-2), "mismatch (bf16)"

    # 4) linear_trans=False (EmbeddingBag only), gather path.
    p32_nl = prepare_params(emb_weight, compute_dtype=jnp.float32)
    out_nl = jax.block_until_ready(
        text_embedding_forward(text, offsets, p32_nl, use_gather=True))
    assert out_nl.shape == (num_bags, embed_dim)
    assert jnp.allclose(out_nl, ref_nolin, atol=1e-5, rtol=1e-5), "mismatch (no linear)"

    print("KERNEL_OK")
</pallas_src>

<mosaic_0001>
module attributes {stable_mosaic.version = 11 : i64} {
  func.func @_onehot_pool_kernel(%arg0: i32, %arg1: memref<128x1xi32, #tpu.memory_space<vmem>>, %arg2: memref<8x1xi32, #tpu.memory_space<vmem>>, %arg3: memref<8x1xi32, #tpu.memory_space<vmem>>, %arg4: memref<128x128xf32, #tpu.memory_space<vmem>>, %arg5: memref<128x128xf32, #tpu.memory_space<vmem>>, %arg6: memref<1x128xf32, #tpu.memory_space<vmem>>, %arg7: memref<8x128xf32, #tpu.memory_space<vmem>>) attributes {dimension_semantics = [#tpu.dimension_semantics<parallel>], iteration_bounds = array<i64: 1>, scalar_prefetch = 0 : i64, scratch_operands = 0 : i64, tpu.core_type = #tpu.core_type<tc>, window_params = [{pipeline_mode = #tpu.pipeline_mode<synchronous>, transform_indices = @transform_0, window_bounds = array<i64: 128, 1>}, {transform_indices = @transform_1, window_bounds = array<i64: 8, 1>}, {transform_indices = @transform_2, window_bounds = array<i64: 8, 1>}, {pipeline_mode = #tpu.pipeline_mode<synchronous>, transform_indices = @transform_3, window_bounds = array<i64: 128, 128>}, {pipeline_mode = #tpu.pipeline_mode<synchronous>, transform_indices = @transform_4, window_bounds = array<i64: 128, 128>}, {pipeline_mode = #tpu.pipeline_mode<synchronous>, transform_indices = @transform_5, window_bounds = array<i64: 1, 128>}, {transform_indices = @transform_6, window_bounds = array<i64: 8, 128>}]} {
    %c0 = arith.constant 0 : index
    %c0_0 = arith.constant 0 : index
    %0 = vector.load %arg2[%c0, %c0_0] : memref<8x1xi32, #tpu.memory_space<vmem>>, vector<8x1xi32>
    %c0_1 = arith.constant 0 : index
    %c0_2 = arith.constant 0 : index
    %1 = vector.load %arg3[%c0_1, %c0_2] : memref<8x1xi32, #tpu.memory_space<vmem>>, vector<8x1xi32>
    %2 = arith.subi %1, %0 : vector<8x1xi32>
    %3 = arith.sitofp %2 : vector<8x1xi32> to vector<8x1xf32>
    %cst = arith.constant 0.000000e+00 : f32
    %4 = vector.broadcast %cst : f32 to vector<8x1xf32>
    %5 = arith.cmpf ogt, %3, %4 : vector<8x1xf32>
    %cst_3 = arith.constant 1.000000e+00 : f32
    %6 = vector.broadcast %cst_3 : f32 to vector<8x1xf32>
    %7 = arith.maximumf %3, %6 : vector<8x1xf32>
    %cst_4 = arith.constant 1.000000e+00 : f32
    %8 = vector.broadcast %cst_4 : f32 to vector<8x1xf32>
    %9 = arith.divf %8, %7 : vector<8x1xf32>
    %cst_5 = arith.constant 0.000000e+00 : f32
    %10 = vector.broadcast %cst_5 : f32 to vector<8x1xf32>
    %11 = arith.select %5, %9, %10 : vector<8x1xi1>, vector<8x1xf32>
    %12 = tpu.iota {dimensions = array<i32: 1>} : vector<8x128xi32>
    %13 = vector.broadcast %0 : vector<8x1xi32> to vector<8x128xi32>
    %14 = arith.cmpi sge, %12, %13 : vector<8x128xi32>
    %15 = vector.broadcast %1 : vector<8x1xi32> to vector<8x128xi32>
    %16 = arith.cmpi slt, %12, %15 : vector<8x128xi32>
    %17 = arith.andi %14, %16 : vector<8x128xi1>
    %cst_6 = arith.constant 0.000000e+00 : f32
    %18 = vector.shape_cast %11 : vector<8x1xf32> to vector<8x1xf32>
    %19 = vector.broadcast %18 : vector<8x1xf32> to vector<8x128xf32>
    %20 = vector.broadcast %cst_6 : f32 to vector<8x128xf32>
    %21 = arith.select %17, %19, %20 : vector<8x128xi1>, vector<8x128xf32>
    %c0_7 = arith.constant 0 : index
    %c0_8 = arith.constant 0 : index
    %22 = vector.load %arg1[%c0_7, %c0_8] : memref<128x1xi32, #tpu.memory_space<vmem>>, vector<128x1xi32>
    %23 = tpu.iota {dimensions = array<i32: 1>} : vector<128x128xi32>
    %24 = vector.broadcast %22 : vector<128x1xi32> to vector<128x128xi32>
    %25 = arith.cmpi eq, %24, %23 : vector<128x128xi32>
    %26 = arith.extui %25 : vector<128x128xi1> to vector<128x128xi32>
    %27 = arith.sitofp %26 : vector<128x128xi32> to vector<128x128xf32>
    %cst_9 = arith.constant dense<0.000000e+00> : vector<8x128xf32>
    %28 = tpu.matmul %21, %27, %cst_9 {dimension_numbers = #tpu.dot_dimension_numbers<[1], [0], [0], [1], [0, 0, 1, 1], [], []>} : vector<8x128xf32>, vector<128x128xf32>, vector<8x128xf32> -> vector<8x128xf32>
    %c0_10 = arith.constant 0 : index
    %c0_11 = arith.constant 0 : index
    %29 = vector.load %arg4[%c0_10, %c0_11] : memref<128x128xf32, #tpu.memory_space<vmem>>, vector<128x128xf32>
    %cst_12 = arith.constant dense<0.000000e+00> : vector<8x128xf32>
    %30 = tpu.matmul %28, %29, %cst_12 {dimension_numbers = #tpu.dot_dimension_numbers<[1], [0], [0], [1], [0, 0, 1, 1], [], []>} : vector<8x128xf32>, vector<128x128xf32>, vector<8x128xf32> -> vector<8x128xf32>
    %c0_13 = arith.constant 0 : index
    %c0_14 = arith.constant 0 : index
    %31 = vector.load %arg5[%c0_13, %c0_14] : memref<128x128xf32, #tpu.memory_space<vmem>>, vector<128x128xf32>
    %cst_15 = arith.constant dense<0.000000e+00> : vector<8x128xf32>
    %32 = tpu.matmul %30, %31, %cst_15 {dimension_numbers = #tpu.dot_dimension_numbers<[1], [0], [0], [1], [0, 0, 1, 1], [], []>} : vector<8x128xf32>, vector<128x128xf32>, vector<8x128xf32> -> vector<8x128xf32>
    %c0_16 = arith.constant 0 : index
    %c0_17 = arith.constant 0 : index
    %33 = vector.load %arg6[%c0_16, %c0_17] : memref<1x128xf32, #tpu.memory_space<vmem>>, vector<1x128xf32>
    %34 = vector.broadcast %33 : vector<1x128xf32> to vector<8x128xf32>
    %35 = arith.addf %32, %34 : vector<8x128xf32>
    %c0_18 = arith.constant 0 : index
    %c0_19 = arith.constant 0 : index
    %36 = vector.load %arg7[%c0_18, %c0_19] : memref<8x128xf32, #tpu.memory_space<vmem>>, vector<8x128xf32>
    tpu.vector_store %arg7[%c0_18, %c0_19], %35 {strides = array<i32>} : memref<8x128xf32, #tpu.memory_space<vmem>>, vector<8x128xf32>,
    return
  }
  func.func @transform_0(%arg0: i32) -> (i32, i32) {
    %c0_i32 = arith.constant 0 : i32
    %c0_i32_0 = arith.constant 0 : i32
    %c0_i32_1 = arith.constant 0 : i32
    return %c0_i32, %c0_i32_0 : i32, i32
  }
  func.func @transform_1(%arg0: i32) -> (i32, i32) {
    %c0_i32 = arith.constant 0 : i32
    %c0_i32_0 = arith.constant 0 : i32
    return %arg0, %c0_i32 : i32, i32
  }
  func.func @transform_2(%arg0: i32) -> (i32, i32) {
    %c0_i32 = arith.constant 0 : i32
    %c0_i32_0 = arith.constant 0 : i32
    return %arg0, %c0_i32 : i32, i32
  }
  func.func @transform_3(%arg0: i32) -> (i32, i32) {
    %c0_i32 = arith.constant 0 : i32
    %c0_i32_0 = arith.constant 0 : i32
    %c0_i32_1 = arith.constant 0 : i32
    return %c0_i32, %c0_i32_0 : i32, i32
  }
  func.func @transform_4(%arg0: i32) -> (i32, i32) {
    %c0_i32 = arith.constant 0 : i32
    %c0_i32_0 = arith.constant 0 : i32
    %c0_i32_1 = arith.constant 0 : i32
    return %c0_i32, %c0_i32_0 : i32, i32
  }
  func.func @transform_5(%arg0: i32) -> (i32, i32) {
    %c0_i32 = arith.constant 0 : i32
    %c0_i32_0 = arith.constant 0 : i32
    %c0_i32_1 = arith.constant 0 : i32
    return %c0_i32, %c0_i32_0 : i32, i32
  }
  func.func @transform_6(%arg0: i32) -> (i32, i32) {
    %c0_i32 = arith.constant 0 : i32
    %c0_i32_0 = arith.constant 0 : i32
    return %arg0, %c0_i32 : i32, i32
  }
}

</mosaic_0001>

<llo_original>
// kernel: tpu_custom_call.1
$region0: #{tpu_custom_call.1}
  #allocation0 [shape = 'u32[]', space=smem, size = 0x4, offset = 0x4, fixed_abs, tag = 'smem constant byte address 0x4 - core index']
  #allocation1 [shape = 'u32[144,128]{1,0:T(1,128)}', space=vmem, size = 0x12000, scoped, tag = 'internal scratch']
  %s0 = inlined_call_operand.vmem [shape: s32[128,1], index: 0, kind: input, shape index: {}]
  %s1 = inlined_call_operand.vmem [shape: s32[8,1], index: 1, kind: input, shape index: {}]
  %s2 = inlined_call_operand.vmem [shape: s32[8,1], index: 2, kind: input, shape index: {}]
  %s3 = inlined_call_operand.vmem [shape: f32[128,128], index: 3, kind: input, shape index: {}]
  %s4 = inlined_call_operand.hbm [shape: f32[128,128], index: 4, kind: input, shape index: {}]
  %s5 = inlined_call_operand.vmem [shape: f32[1,128], index: 5, kind: input, shape index: {}]
  %s6 = inlined_call_operand.hbm [shape: f32[8,128], index: 6, kind: output, shape index: {}]
  %s7 = sld [smem:[#allocation0]]
  $region38: #{tpu_custom_call.1} parent=0
    _
  %s9 = ssub.s32 1, %s7
  %s10 = scalar_select 0, %s9, %s7
  $region1: #{tpu_custom_call.1} parent=0
    #allocation2 [shape = 'u8[65536]{0}', space=vmem, size = 0x10000, scoped, tag = 'input window, operand 4, single buffered']
    #allocation3 [shape = 's32[1]{0}', space=sflag, size = 0x4, scoped, tag = 'scoped memory for tpu_custom_call.1']
    #allocation4 [shape = 's32[1]{0}', space=sflag, size = 0x4, scoped, tag = 'scoped memory for tpu_custom_call.1']
    #allocation5 [shape = 'u8[4096]{0}', space=vmem, size = 0x1000, scoped, tag = 'output window, operand 0, single buffered']
    %11 = vsyncpa [#allocation3], 0
    %12 = vsyncpa [#allocation4], 0
    // Predicated region
    $region2: #{tpu_custom_call.1} parent=1 // pred_check
      _
    $region3: #{tpu_custom_call.1} parent=1 // pred_check_branch
      %14 = sbr.rel (0) target = $region5
    $region4: #{tpu_custom_call.1} parent=1 // pred_region
      _
    $region5: #{tpu_custom_call.1} parent=1 // pred_fallthru
      _
    // Predicated region
    $region6: #{tpu_custom_call.1} parent=1 // pred_check
      _
    $region7: #{tpu_custom_call.1} parent=1 // pred_check_branch
      %16 = sbr.rel (0) target = $region9
    $region8: #{tpu_custom_call.1} parent=1 // pred_region
      _
    $region9: #{tpu_custom_call.1} parent=1 // pred_fallthru
      _
    // Predicated region
    $region10: #{tpu_custom_call.1} parent=1 // pred_check
      _
    $region11: #{tpu_custom_call.1} parent=1 // pred_check_branch
      %18 = sbr.rel (0) target = $region13
    $region12: #{tpu_custom_call.1} parent=1 // pred_region
      _
    $region13: #{tpu_custom_call.1} parent=1 // pred_fallthru
      _
    // Predicated region
    $region14: #{tpu_custom_call.1} parent=1 // pred_check
      _
    $region15: #{tpu_custom_call.1} parent=1 // pred_check_branch
      %20 = sbr.rel (0) target = $region17
    $region16: #{tpu_custom_call.1} parent=1 // pred_region
      _
    $region17: #{tpu_custom_call.1} parent=1 // pred_fallthru
      _
    // Predicated region
    $region18: #{tpu_custom_call.1} parent=1 // pred_check
      _
    $region19: #{tpu_custom_call.1} parent=1 // pred_check_branch
      %22 = sbr.rel (0) target = $region21
    $region20: #{tpu_custom_call.1} parent=1 // pred_region
      %s24 = ssub.s32 2048, 2048
      %25 = vsyncadd [#allocation3], %s24
      %s26 = sshll.u32 [#allocation2], 4
      %s27 = int_to_ptr.vmem [resolvable:$true] %s26
      %32 = dma.hbm_to_vmem [thread:$0]  %s4, 2048, %s27, [#allocation3], 128, 128, 8
    $region21: #{tpu_custom_call.1} parent=1 // pred_fallthru
      _
    // Predicated region
    $region22: #{tpu_custom_call.1} parent=1 // pred_check
      _
    $region23: #{tpu_custom_call.1} parent=1 // pred_check_branch
      %34 = sbr.rel (0) target = $region25
    $region24: #{tpu_custom_call.1} parent=1 // pred_region
      _
    $region25: #{tpu_custom_call.1} parent=1 // pred_fallthru
      _
    // Predicated region
    $region26: #{tpu_custom_call.1} parent=1 // pred_check
      _
    $region27: #{tpu_custom_call.1} parent=1 // pred_check_branch
      %36 = sbr.rel (0) target = $region29
    $region28: #{tpu_custom_call.1} parent=1 // pred_region
      %37 = dma.done [#allocation3], 2048
    $region29: #{tpu_custom_call.1} parent=1 // pred_fallthru
      _
    %v38 = vld [vmem:[%s1] sm:$0xff]
    %v39 = vld [vmem:[%s2] sm:$0xff]
    %v40 = vsub.s32 %v39, %v38
    %v41 = vcvt.s32.f32 %v40
    %vm42 = vcmp.gt.f32.partialorder %v41, 0.0
    %v43 = vmax.f32 %v41, 1.0
    %v44 = vrcp.pop %v43
    %v45 = vmul.f32 1.0, %v44
    %v46 = vsel %vm42, %v45, 0.0
    %v47 = vlaneseq
    %v48 = vand.u32 %v47, 127
    %49 = vset.pattern.permute.xlu0 0
    %50 = vperm.xlu0 %49, %v38
    %v51 = vpop.permute.xlu0 %50
    %vm52 = vcmp.ge.s32.totalorder %v48, %v51
    %53 = vset.pattern.permute.xlu0 0
    %54 = vperm.xlu0 %53, %v39
    %v55 = vpop.permute.xlu0 %54
    %vm56 = vcmp.lt.s32.totalorder %v48, %v55
    %vm57 = vmand %vm52, %vm56
    %59 = vset.pattern.permute.xlu0 0
    %60 = vperm.xlu0 %59, %v46
    %v61 = vpop.permute.xlu0 %60
    %v63 = vsel %vm57, %v61, 0.0
    %v64 = vld [vmem:[%s0] sm:$0xff]
    %v65 = vld [vmem:[%s0 + $0x8] sm:$0xff]
    %v66 = vld [vmem:[%s0 + $0x10] sm:$0xff]
    %v67 = vld [vmem:[%s0 + $0x18] sm:$0xff]
    %v68 = vld [vmem:[%s0 + $0x20] sm:$0xff]
    %v69 = vld [vmem:[%s0 + $0x28] sm:$0xff]
    %v70 = vld [vmem:[%s0 + $0x30] sm:$0xff]
    %v71 = vld [vmem:[%s0 + $0x38] sm:$0xff]
    %v72 = vld [vmem:[%s0 + $0x40] sm:$0xff]
    %v73 = vld [vmem:[%s0 + $0x48] sm:$0xff]
    %v74 = vld [vmem:[%s0 + $0x50] sm:$0xff]
    %v75 = vld [vmem:[%s0 + $0x58] sm:$0xff]
    %v76 = vld [vmem:[%s0 + $0x60] sm:$0xff]
    %v77 = vld [vmem:[%s0 + $0x68] sm:$0xff]
    %v78 = vld [vmem:[%s0 + $0x70] sm:$0xff]
    %v79 = vld [vmem:[%s0 + $0x78] sm:$0xff]
    %80 = vset.pattern.permute.xlu0 0
    %81 = vperm.xlu0 %80, %v64
    %v82 = vpop.permute.xlu0 %81
    %83 = vset.pattern.permute.xlu0 0
    %84 = vperm.xlu0 %83, %v65
    %v85 = vpop.permute.xlu0 %84
    %86 = vset.pattern.permute.xlu0 0
    %87 = vperm.xlu0 %86, %v66
    %v88 = vpop.permute.xlu0 %87
    %89 = vset.pattern.permute.xlu0 0
    %90 = vperm.xlu0 %89, %v67
    %v91 = vpop.permute.xlu0 %90
    %92 = vset.pattern.permute.xlu0 0
    %93 = vperm.xlu0 %92, %v68
    %v94 = vpop.permute.xlu0 %93
    %95 = vset.pattern.permute.xlu0 0
    %96 = vperm.xlu0 %95, %v69
    %v97 = vpop.permute.xlu0 %96
    %98 = vset.pattern.permute.xlu0 0
    %99 = vperm.xlu0 %98, %v70
    %v100 = vpop.permute.xlu0 %99
    %101 = vset.pattern.permute.xlu0 0
    %102 = vperm.xlu0 %101, %v71
    %v103 = vpop.permute.xlu0 %102
    %104 = vset.pattern.permute.xlu0 0
    %105 = vperm.xlu0 %104, %v72
    %v106 = vpop.permute.xlu0 %105
    %107 = vset.pattern.permute.xlu0 0
    %108 = vperm.xlu0 %107, %v73
    %v109 = vpop.permute.xlu0 %108
    %110 = vset.pattern.permute.xlu0 0
    %111 = vperm.xlu0 %110, %v74
    %v112 = vpop.permute.xlu0 %111
    %113 = vset.pattern.permute.xlu0 0
    %114 = vperm.xlu0 %113, %v75
    %v115 = vpop.permute.xlu0 %114
    %116 = vset.pattern.permute.xlu0 0
    %117 = vperm.xlu0 %116, %v76
    %v118 = vpop.permute.xlu0 %117
    %119 = vset.pattern.permute.xlu0 0
    %120 = vperm.xlu0 %119, %v77
    %v121 = vpop.permute.xlu0 %120
    %122 = vset.pattern.permute.xlu0 0
    %123 = vperm.xlu0 %122, %v78
    %v124 = vpop.permute.xlu0 %123
    %125 = vset.pattern.permute.xlu0 0
    %126 = vperm.xlu0 %125, %v79
    %v127 = vpop.permute.xlu0 %126
    %vm128 = vcmp.eq.s32.totalorder %v82, %v48
    %vm129 = vcmp.eq.s32.totalorder %v85, %v48
    %vm130 = vcmp.eq.s32.totalorder %v88, %v48
    %vm131 = vcmp.eq.s32.totalorder %v91, %v48
    %vm132 = vcmp.eq.s32.totalorder %v94, %v48
    %vm133 = vcmp.eq.s32.totalorder %v97, %v48
    %vm134 = vcmp.eq.s32.totalorder %v100, %v48
    %vm135 = vcmp.eq.s32.totalorder %v103, %v48
    %vm136 = vcmp.eq.s32.totalorder %v106, %v48
    %vm137 = vcmp.eq.s32.totalorder %v109, %v48
    %vm138 = vcmp.eq.s32.totalorder %v112, %v48
    %vm139 = vcmp.eq.s32.totalorder %v115, %v48
    %vm140 = vcmp.eq.s32.totalorder %v118, %v48
    %vm141 = vcmp.eq.s32.totalorder %v121, %v48
    %vm142 = vcmp.eq.s32.totalorder %v124, %v48
    %vm143 = vcmp.eq.s32.totalorder %v127, %v48
    %v144 = vsel %vm128, 1, 0
    %v145 = vsel %vm129, 1, 0
    %v146 = vsel %vm130, 1, 0
    %v147 = vsel %vm131, 1, 0
    %v148 = vsel %vm132, 1, 0
    %v149 = vsel %vm133, 1, 0
    %v150 = vsel %vm134, 1, 0
    %v151 = vsel %vm135, 1, 0
    %v152 = vsel %vm136, 1, 0
    %v153 = vsel %vm137, 1, 0
    %v154 = vsel %vm138, 1, 0
    %v155 = vsel %vm139, 1, 0
    %v156 = vsel %vm140, 1, 0
    %v157 = vsel %vm141, 1, 0
    %v158 = vsel %vm142, 1, 0
    %v159 = vsel %vm143, 1, 0
    %v160 = vcvt.s32.f32 %v144
    %v161 = vcvt.s32.f32 %v145
    %v162 = vcvt.s32.f32 %v146
    %v163 = vcvt.s32.f32 %v147
    %v164 = vcvt.s32.f32 %v148
    %v165 = vcvt.s32.f32 %v149
    %v166 = vcvt.s32.f32 %v150
    %v167 = vcvt.s32.f32 %v151
    %v168 = vcvt.s32.f32 %v152
    %v169 = vcvt.s32.f32 %v153
    %v170 = vcvt.s32.f32 %v154
    %v171 = vcvt.s32.f32 %v155
    %v172 = vcvt.s32.f32 %v156
    %v173 = vcvt.s32.f32 %v157
    %v174 = vcvt.s32.f32 %v158
    %v175 = vcvt.s32.f32 %v159
    %176 = vmatprep.subr.mxu0 0.0
    %177 = vmatpush1.msra.mxu0 %v160
    %178 = vmatprep.subr.mxu0 0.0
    %179 = vmatpush1.msra.mxu0 %v161
    %180 = vmatprep.subr.mxu0 0.0
    %181 = vmatpush1.msra.mxu0 %v162
    %182 = vmatprep.subr.mxu0 0.0
    %183 = vmatpush1.msra.mxu0 %v163
    %184 = vmatprep.subr.mxu0 0.0
    %185 = vmatpush1.msra.mxu0 %v164
    %186 = vmatprep.subr.mxu0 0.0
    %187 = vmatpush1.msra.mxu0 %v165
    %188 = vmatprep.subr.mxu0 0.0
    %189 = vmatpush1.msra.mxu0 %v166
    %190 = vmatprep.subr.mxu0 0.0
    %191 = vmatpush1.msra.mxu0 %v167
    %192 = vmatprep.subr.mxu0 0.0
    %193 = vmatpush1.msra.mxu0 %v168
    %194 = vmatprep.subr.mxu0 0.0
    %195 = vmatpush1.msra.mxu0 %v169
    %196 = vmatprep.subr.mxu0 0.0
    %197 = vmatpush1.msra.mxu0 %v170
    %198 = vmatprep.subr.mxu0 0.0
    %199 = vmatpush1.msra.mxu0 %v171
    %200 = vmatprep.subr.mxu0 0.0
    %201 = vmatpush1.msra.mxu0 %v172
    %202 = vmatprep.subr.mxu0 0.0
    %203 = vmatpush1.msra.mxu0 %v173
    %204 = vmatprep.subr.mxu0 0.0
    %205 = vmatpush1.msra.mxu0 %v174
    %206 = vmatprep.subr.mxu0 0.0
    %207 = vmatpush1.msra.mxu0 %v175
    %208 = vmatprep.subr.mxu0 0.0
    %209 = vmatpush1.msra.mxu0 0.0
    %210 = vmatprep.subr.mxu0 0.0
    %211 = vmatpush1.msra.mxu0 0.0
    %212 = vmatprep.subr.mxu0 0.0
    %213 = vmatpush1.msra.mxu0 0.0
    %214 = vmatprep.subr.mxu0 0.0
    %215 = vmatpush1.msra.mxu0 0.0
    %216 = vmatprep.subr.mxu0 0.0
    %217 = vmatpush1.msra.mxu0 0.0
    %218 = vmatprep.subr.mxu0 0.0
    %219 = vmatpush1.msra.mxu0 0.0
    %220 = vmatprep.subr.mxu0 0.0
    %221 = vmatpush1.msra.mxu0 0.0
    %222 = vmatprep.subr.mxu0 0.0
    %223 = vmatpush1.msra.mxu0 0.0
    %224 = vmatprep.subr.mxu0 0.0
    %225 = vmatpush1.msra.mxu0 0.0
    %226 = vmatprep.subr.mxu0 0.0
    %227 = vmatpush1.msra.mxu0 0.0
    %228 = vmatprep.subr.mxu0 0.0
    %229 = vmatpush1.msra.mxu0 0.0
    %230 = vmatprep.subr.mxu0 0.0
    %231 = vmatpush1.msra.mxu0 0.0
    %232 = vmatprep.subr.mxu0 0.0
    %233 = vmatpush1.msra.mxu0 0.0
    %234 = vmatprep.subr.mxu0 0.0
    %235 = vmatpush1.msra.mxu0 0.0
    %236 = vmatprep.subr.mxu0 0.0
    %237 = vmatpush1.msra.mxu0 0.0
    %238 = vmatprep.subr.mxu0 0.0
    %239 = vmatpush1.msra.mxu0 0.0
    %240 = vmatprep.mubr.f32.mxu0 0.0
    %241 = vmatmul.mubr.f32.gmra.mrb[0].mxu0 %v63
    %v242 = vpop.f32.mrb[0].mxu0
    %v243 = vadd.f32 0.0, %v242
    %v244 = vpop.f32.mrb[0].mxu0
    %245 = vdwg.mxu0
    %v246 = vld [vmem:[%s3] sm:$0xff]
    %v247 = vld [vmem:[%s3 + $0x8] sm:$0xff]
    %v248 = vld [vmem:[%s3 + $0x10] sm:$0xff]
    %v249 = vld [vmem:[%s3 + $0x18] sm:$0xff]
    %v250 = vld [vmem:[%s3 + $0x20] sm:$0xff]
    %v251 = vld [vmem:[%s3 + $0x28] sm:$0xff]
    %v252 = vld [vmem:[%s3 + $0x30] sm:$0xff]
    %v253 = vld [vmem:[%s3 + $0x38] sm:$0xff]
    %v254 = vld [vmem:[%s3 + $0x40] sm:$0xff]
    %v255 = vld [vmem:[%s3 + $0x48] sm:$0xff]
    %v256 = vld [vmem:[%s3 + $0x50] sm:$0xff]
    %v257 = vld [vmem:[%s3 + $0x58] sm:$0xff]
    %v258 = vld [vmem:[%s3 + $0x60] sm:$0xff]
    %v259 = vld [vmem:[%s3 + $0x68] sm:$0xff]
    %v260 = vld [vmem:[%s3 + $0x70] sm:$0xff]
    %v261 = vld [vmem:[%s3 + $0x78] sm:$0xff]
    %262 = vmatprep.subr.mxu0 0.0
    %263 = vmatpush1.msra.mxu0 %v246
    %264 = vmatprep.subr.mxu0 0.0
    %265 = vmatpush1.msra.mxu0 %v247
    %266 = vmatprep.subr.mxu0 0.0
    %267 = vmatpush1.msra.mxu0 %v248
    %268 = vmatprep.subr.mxu0 0.0
    %269 = vmatpush1.msra.mxu0 %v249
    %270 = vmatprep.subr.mxu0 0.0
    %271 = vmatpush1.msra.mxu0 %v250
    %272 = vmatprep.subr.mxu0 0.0
    %273 = vmatpush1.msra.mxu0 %v251
    %274 = vmatprep.subr.mxu0 0.0
    %275 = vmatpush1.msra.mxu0 %v252
    %276 = vmatprep.subr.mxu0 0.0
    %277 = vmatpush1.msra.mxu0 %v253
    %278 = vmatprep.subr.mxu0 0.0
    %279 = vmatpush1.msra.mxu0 %v254
    %280 = vmatprep.subr.mxu0 0.0
    %281 = vmatpush1.msra.mxu0 %v255
    %282 = vmatprep.subr.mxu0 0.0
    %283 = vmatpush1.msra.mxu0 %v256
    %284 = vmatprep.subr.mxu0 0.0
    %285 = vmatpush1.msra.mxu0 %v257
    %286 = vmatprep.subr.mxu0 0.0
    %287 = vmatpush1.msra.mxu0 %v258
    %288 = vmatprep.subr.mxu0 0.0
    %289 = vmatpush1.msra.mxu0 %v259
    %290 = vmatprep.subr.mxu0 0.0
    %291 = vmatpush1.msra.mxu0 %v260
    %292 = vmatprep.subr.mxu0 0.0
    %293 = vmatpush1.msra.mxu0 %v261
    %294 = vmatprep.subr.mxu0 0.0
    %295 = vmatpush1.msra.mxu0 0.0
    %296 = vmatprep.subr.mxu0 0.0
    %297 = vmatpush1.msra.mxu0 0.0
    %298 = vmatprep.subr.mxu0 0.0
    %299 = vmatpush1.msra.mxu0 0.0
    %300 = vmatprep.subr.mxu0 0.0
    %301 = vmatpush1.msra.mxu0 0.0
    %302 = vmatprep.subr.mxu0 0.0
    %303 = vmatpush1.msra.mxu0 0.0
    %304 = vmatprep.subr.mxu0 0.0
    %305 = vmatpush1.msra.mxu0 0.0
    %306 = vmatprep.subr.mxu0 0.0
    %307 = vmatpush1.msra.mxu0 0.0
    %308 = vmatprep.subr.mxu0 0.0
    %309 = vmatpush1.msra.mxu0 0.0
    %310 = vmatprep.subr.mxu0 0.0
    %311 = vmatpush1.msra.mxu0 0.0
    %312 = vmatprep.subr.mxu0 0.0
    %313 = vmatpush1.msra.mxu0 0.0
    %314 = vmatprep.subr.mxu0 0.0
    %315 = vmatpush1.msra.mxu0 0.0
    %316 = vmatprep.subr.mxu0 0.0
    %317 = vmatpush1.msra.mxu0 0.0
    %318 = vmatprep.subr.mxu0 0.0
    %319 = vmatpush1.msra.mxu0 0.0
    %320 = vmatprep.subr.mxu0 0.0
    %321 = vmatpush1.msra.mxu0 0.0
    %322 = vmatprep.subr.mxu0 0.0
    %323 = vmatpush1.msra.mxu0 0.0
    %324 = vmatprep.subr.mxu0 0.0
    %325 = vmatpush1.msra.mxu0 0.0
    %326 = vmatprep.mubr.f32.mxu0 0.0
    %327 = vmatmul.mubr.f32.gmra.mrb[0].mxu0 %v243
    %v328 = vpop.f32.mrb[0].mxu0
    %v329 = vadd.f32 0.0, %v328
    %v330 = vpop.f32.mrb[0].mxu0
    %331 = vdwg.mxu0
    %v332 = vld [vmem:[#allocation2] sm:$0xff]
    %v333 = vld [vmem:[#allocation2 + $0x8] sm:$0xff]
    %v334 = vld [vmem:[#allocation2 + $0x10] sm:$0xff]
    %v335 = vld [vmem:[#allocation2 + $0x18] sm:$0xff]
    %v336 = vld [vmem:[#allocation2 + $0x20] sm:$0xff]
    %v337 = vld [vmem:[#allocation2 + $0x28] sm:$0xff]
    %v338 = vld [vmem:[#allocation2 + $0x30] sm:$0xff]
    %v339 = vld [vmem:[#allocation2 + $0x38] sm:$0xff]
    %v340 = vld [vmem:[#allocation2 + $0x40] sm:$0xff]
    %v341 = vld [vmem:[#allocation2 + $0x48] sm:$0xff]
    %v342 = vld [vmem:[#allocation2 + $0x50] sm:$0xff]
    %v343 = vld [vmem:[#allocation2 + $0x58] sm:$0xff]
    %v344 = vld [vmem:[#allocation2 + $0x60] sm:$0xff]
    %v345 = vld [vmem:[#allocation2 + $0x68] sm:$0xff]
    %v346 = vld [vmem:[#allocation2 + $0x70] sm:$0xff]
    %v347 = vld [vmem:[#allocation2 + $0x78] sm:$0xff]
    %v348 = vld [vmem:[%s5] sm:$0x1]
    %v350 = vlaneseq
    %v351 = vshrl.u32 %v350, 7
    %v352 = vsub.s32 0, %v351
    %v353 = vrot.slane %v348, %v352
    %355 = vmatprep.subr.mxu0 0.0
    %356 = vmatpush1.msra.mxu0 %v332
    %357 = vmatprep.subr.mxu0 0.0
    %358 = vmatpush1.msra.mxu0 %v333
    %359 = vmatprep.subr.mxu0 0.0
    %360 = vmatpush1.msra.mxu0 %v334
    %361 = vmatprep.subr.mxu0 0.0
    %362 = vmatpush1.msra.mxu0 %v335
    %363 = vmatprep.subr.mxu0 0.0
    %364 = vmatpush1.msra.mxu0 %v336
    %365 = vmatprep.subr.mxu0 0.0
    %366 = vmatpush1.msra.mxu0 %v337
    %367 = vmatprep.subr.mxu0 0.0
    %368 = vmatpush1.msra.mxu0 %v338
    %369 = vmatprep.subr.mxu0 0.0
    %370 = vmatpush1.msra.mxu0 %v339
    %371 = vmatprep.subr.mxu0 0.0
    %372 = vmatpush1.msra.mxu0 %v340
    %373 = vmatprep.subr.mxu0 0.0
    %374 = vmatpush1.msra.mxu0 %v341
    %375 = vmatprep.subr.mxu0 0.0
    %376 = vmatpush1.msra.mxu0 %v342
    %377 = vmatprep.subr.mxu0 0.0
    %378 = vmatpush1.msra.mxu0 %v343
    %379 = vmatprep.subr.mxu0 0.0
    %380 = vmatpush1.msra.mxu0 %v344
    %381 = vmatprep.subr.mxu0 0.0
    %382 = vmatpush1.msra.mxu0 %v345
    %383 = vmatprep.subr.mxu0 0.0
    %384 = vmatpush1.msra.mxu0 %v346
    %385 = vmatprep.subr.mxu0 0.0
    %386 = vmatpush1.msra.mxu0 %v347
    %387 = vmatprep.subr.mxu0 0.0
    %388 = vmatpush1.msra.mxu0 0.0
    %389 = vmatprep.subr.mxu0 0.0
    %390 = vmatpush1.msra.mxu0 0.0
    %391 = vmatprep.subr.mxu0 0.0
    %392 = vmatpush1.msra.mxu0 0.0
    %393 = vmatprep.subr.mxu0 0.0
    %394 = vmatpush1.msra.mxu0 0.0
    %395 = vmatprep.subr.mxu0 0.0
    %396 = vmatpush1.msra.mxu0 0.0
    %397 = vmatprep.subr.mxu0 0.0
    %398 = vmatpush1.msra.mxu0 0.0
    %399 = vmatprep.subr.mxu0 0.0
    %400 = vmatpush1.msra.mxu0 0.0
    %401 = vmatprep.subr.mxu0 0.0
    %402 = vmatpush1.msra.mxu0 0.0
    %403 = vmatprep.subr.mxu0 0.0
    %404 = vmatpush1.msra.mxu0 0.0
    %405 = vmatprep.subr.mxu0 0.0
    %406 = vmatpush1.msra.mxu0 0.0
    %407 = vmatprep.subr.mxu0 0.0
    %408 = vmatpush1.msra.mxu0 0.0
    %409 = vmatprep.subr.mxu0 0.0
    %410 = vmatpush1.msra.mxu0 0.0
    %411 = vmatprep.subr.mxu0 0.0
    %412 = vmatpush1.msra.mxu0 0.0
    %413 = vmatprep.subr.mxu0 0.0
    %414 = vmatpush1.msra.mxu0 0.0
    %415 = vmatprep.subr.mxu0 0.0
    %416 = vmatpush1.msra.mxu0 0.0
    %417 = vmatprep.subr.mxu0 0.0
    %418 = vmatpush1.msra.mxu0 0.0
    %419 = vmatprep.mubr.f32.mxu0 0.0
    %420 = vmatmul.mubr.f32.gmra.mrb[0].mxu0 %v329
    %v421 = vpop.f32.mrb[0].mxu0
    %v422 = vadd.f32 %v353, %v421
    %v423 = vpop.f32.mrb[0].mxu0
    %424 = vdwg.mxu0
    %425 = vst [vmem:[#allocation5] sm:$0xff] %v422
    // Predicated region
    $region30: #{tpu_custom_call.1} parent=1 // pred_check
      _
    $region31: #{tpu_custom_call.1} parent=1 // pred_check_branch
      %427 = sbr.rel (0) target = $region33
    $region32: #{tpu_custom_call.1} parent=1 // pred_region
      %s429 = ssub.s32 128, 128
      %430 = vsyncadd [#allocation4], %s429
      %s432 = sshll.u32 [#allocation5], 4
      %s433 = int_to_ptr.vmem [resolvable:$true] %s432
      %435 = dma.vmem_to_hbm [thread:$0]  %s433, 128, %s6, [#allocation4]
    $region33: #{tpu_custom_call.1} parent=1 // pred_fallthru
      _
    // Predicated region
    $region34: #{tpu_custom_call.1} parent=1 // pred_check
      _
    $region35: #{tpu_custom_call.1} parent=1 // pred_check_branch
      %437 = sbr.rel (0) target = $region37
    $region36: #{tpu_custom_call.1} parent=1 // pred_region
      %438 = dma.done [#allocation4], 128
    $region37: #{tpu_custom_call.1} parent=1 // pred_fallthru
      _
    %439 = vsyncpa [#allocation3], 1
    %440 = vsyncpa [#allocation4], 1

</llo_original>
